<compile_context>
chip_gen: v5e
topology: v5e:2x2
jax: 0.10.0
libtpu: 0.0.40
codegen_flags: <defaults>
</compile_context>

<pallas_src>
import functools

import jax
import jax.numpy as jnp
from jax.experimental import pallas as pl
from jax.experimental.pallas import tpu as pltpu

LANE = 128


def _round_up(x, m):
    return ((x + m - 1) // m) * m


def qnet_kernel(x_ref, w1_ref, b1_ref, w2_ref, b2_ref, w3_ref, b3_ref, o_ref,
                *, matmul_dtype):
    # Layer 1: K=4, keep it off the MXU -> 4 f32 broadcast-FMAs on the VPU.
    x = x_ref[...]          # (tb, in_dim) f32
    w1 = w1_ref[...]        # (in_dim, hidden) f32
    in_dim = w1.shape[0]
    h1 = b1_ref[...] + x[:, 0:1] * w1[0:1, :]
    for k in range(1, in_dim):
        h1 = h1 + x[:, k:k + 1] * w1[k:k + 1, :]
    h1 = jnp.maximum(h1, 0.0)

    # Layers 2/3: MXU matmuls. Weights arrive already in matmul_dtype (bf16 by
    # default, pre-cast once in the wrapper); accumulate in f32.
    h2 = jnp.dot(h1.astype(matmul_dtype), w2_ref[...],
                 preferred_element_type=jnp.float32) + b2_ref[...]
    h2 = jnp.maximum(h2, 0.0)
    o_ref[...] = jnp.dot(h2.astype(matmul_dtype), w3_ref[...],
                         preferred_element_type=jnp.float32) + b3_ref[...]


@functools.partial(jax.jit, static_argnames=("tile_b", "use_bf16"))
def qnet_forward(x, params, *, tile_b=2048, use_bf16=True):
    """x: (B, 4) float32. params: dict of w1,b1,w2,b2,w3,b3 (f32, weights (in,out)).

    Returns (B, action_size) float32 Q-values.
    """
    w1, b1, w2, b2, w3, b3 = (params["w1"], params["b1"], params["w2"],
                              params["b2"], params["w3"], params["b3"])
    B, in_dim = x.shape
    hidden1 = w1.shape[1]
    hidden2 = w2.shape[1]
    action_size = w3.shape[1]
    matmul_dtype = jnp.bfloat16 if use_bf16 else jnp.float32

    # Lane-dense output: pad the last layer to 128 output lanes so the final
    # store is a full unmasked vst. Padded lanes are exactly zero and sliced off.
    n_pad = _round_up(action_size, LANE)
    w3p = jnp.pad(w3, ((0, 0), (0, n_pad - action_size)))
    b3p = jnp.pad(b3, ((0, 0), (0, n_pad - action_size)))

    # Pre-cast MXU weights once (wrapper-side); layer-1 weights stay f32 (VPU path).
    w2c = w2.astype(matmul_dtype)
    w3c = w3p.astype(matmul_dtype)

    # Batch tiling: multiple of 8 sublanes; pad B up to a multiple of the tile.
    tile_b = max(8, _round_up(min(tile_b, _round_up(B, 8)), 8))
    # v7x: ensure >= 2 grid steps for mid/large batches so ("parallel",) can
    # shard batch tiles across both TensorCores (no-op on v5e/v6e).
    if B > 256 and _round_up(max(B, 8), tile_b) // tile_b < 2:
        tile_b = max(8, _round_up(-(-_round_up(B, 8) // 2), 8))
    b_pad = _round_up(max(B, 8), tile_b)
    xp = x if b_pad == B else jnp.pad(x, ((0, b_pad - B), (0, 0)))

    grid = (b_pad // tile_b,)
    const = lambda a: pl.BlockSpec(a.shape, lambda i: (0,) * a.ndim)

    itemsize = 2 if use_bf16 else 4
    flops = 2 * b_pad * (in_dim * hidden1 + hidden1 * hidden2 + hidden2 * n_pad)
    bytes_accessed = (4 * (xp.size + w1.size + b1.size + b2.size + b3p.size
                           + b_pad * n_pad)
                      + itemsize * (w2c.size + w3c.size))

    out = pl.pallas_call(
        functools.partial(qnet_kernel, matmul_dtype=matmul_dtype),
        out_shape=jax.ShapeDtypeStruct((b_pad, n_pad), jnp.float32),
        grid=grid,
        in_specs=[
            # x: pipelined per batch tile.
            pl.BlockSpec((tile_b, in_dim), lambda i: (i, 0)),
            # weights/biases: constant index_map -> DMA'd once, VMEM-resident.
            const(w1), const(b1), const(w2c), const(b2), const(w3c), const(b3p),
        ],
        out_specs=pl.BlockSpec((tile_b, n_pad), lambda i: (i, 0)),
        compiler_params=pltpu.CompilerParams(
            dimension_semantics=("parallel",)),
        cost_estimate=pl.CostEstimate(
            flops=flops, transcendentals=0, bytes_accessed=bytes_accessed),
    )(xp, w1, b1, w2c, b2, w3c, b3p)

    # Slice fuses inside this jit (no separate un-overlapped HBM pass).
    return out[:B, :action_size]


def init_qnet_params(key, action_size):
    """Deterministic init mimicking PyTorch's default Linear init
    (uniform(-1/sqrt(fan_in), 1/sqrt(fan_in))). Weights stored (in, out)."""
    dims = [(4, 128), (128, 128), (128, action_size)]
    params = {}
    for idx, (fan_in, fan_out) in enumerate(dims, start=1):
        key, kw, kb = jax.random.split(key, 3)
        bound = 1.0 / jnp.sqrt(jnp.float32(fan_in))
        params[f"w{idx}"] = jax.random.uniform(
            kw, (fan_in, fan_out), jnp.float32, -bound, bound)
        params[f"b{idx}"] = jax.random.uniform(
            kb, (1, fan_out), jnp.float32, -bound, bound)
    return params


def qnet_reference(x, p):
    h1 = jnp.maximum(x @ p["w1"] + p["b1"], 0.0)
    h2 = jnp.maximum(h1 @ p["w2"] + p["b2"], 0.0)
    return h2 @ p["w3"] + p["b3"]


if __name__ == "__main__":
    key = jax.random.PRNGKey(0)
    key, kx = jax.random.split(key)

    batch = 8          # small replay-buffer minibatch
    action_size = 2    # e.g. CartPole-v1

    params = init_qnet_params(key, action_size)
    x = jax.random.normal(kx, (batch, 4), jnp.float32)

    # bf16-matmul path (default): compare vs f32 reference with bf16 tolerance.
    out = jax.block_until_ready(qnet_forward(x, params))
    ref = qnet_reference(x, params)
    assert out.shape == (batch, action_size)
    assert out.dtype == jnp.float32
    assert jnp.allclose(out, ref, atol=5e-2, rtol=5e-2), "bf16 path mismatch"

    # Multi-tile grid + batch-padding path (B not a multiple of the tile).
    x2 = jax.random.normal(jax.random.PRNGKey(1), (40, 4), jnp.float32)
    out2 = jax.block_until_ready(qnet_forward(x2, params, tile_b=16))
    ref2 = qnet_reference(x2, params)
    assert out2.shape == (40, action_size)
    assert jnp.allclose(out2, ref2, atol=5e-2, rtol=5e-2), "tiled path mismatch"

    # Larger batch: exercises the default tile_b heuristic and the >=2-grid-step
    # split (both TCs on v7x).
    x3 = jax.random.normal(jax.random.PRNGKey(2), (512, 4), jnp.float32)
    out3 = jax.block_until_ready(qnet_forward(x3, params))
    ref3 = qnet_reference(x3, params)
    assert out3.shape == (512, action_size)
    assert jnp.allclose(out3, ref3, atol=5e-2, rtol=5e-2), "large-batch mismatch"

    # Pure-f32 path must match the reference tightly.
    out4 = jax.block_until_ready(qnet_forward(x, params, use_bf16=False))
    assert jnp.allclose(out4, ref, atol=1e-5, rtol=1e-5), "f32 path mismatch"

    print("KERNEL_OK")
</pallas_src>

<mosaic_0001>
module attributes {stable_mosaic.version = 11 : i64} {
  func.func @qnet_kernel(%arg0: i32, %arg1: memref<8x4xf32, #tpu.memory_space<vmem>>, %arg2: memref<4x128xf32, #tpu.memory_space<vmem>>, %arg3: memref<1x128xf32, #tpu.memory_space<vmem>>, %arg4: memref<128x128xbf16, #tpu.memory_space<vmem>>, %arg5: memref<1x128xf32, #tpu.memory_space<vmem>>, %arg6: memref<128x128xbf16, #tpu.memory_space<vmem>>, %arg7: memref<1x128xf32, #tpu.memory_space<vmem>>, %arg8: memref<8x128xf32, #tpu.memory_space<vmem>>) attributes {dimension_semantics = [#tpu.dimension_semantics<parallel>], iteration_bounds = array<i64: 1>, scalar_prefetch = 0 : i64, scratch_operands = 0 : i64, tpu.core_type = #tpu.core_type<tc>, window_params = [{transform_indices = @transform_0, window_bounds = array<i64: 8, 4>}, {pipeline_mode = #tpu.pipeline_mode<synchronous>, transform_indices = @transform_1, window_bounds = array<i64: 4, 128>}, {pipeline_mode = #tpu.pipeline_mode<synchronous>, transform_indices = @transform_2, window_bounds = array<i64: 1, 128>}, {pipeline_mode = #tpu.pipeline_mode<synchronous>, transform_indices = @transform_3, window_bounds = array<i64: 128, 128>}, {pipeline_mode = #tpu.pipeline_mode<synchronous>, transform_indices = @transform_4, window_bounds = array<i64: 1, 128>}, {pipeline_mode = #tpu.pipeline_mode<synchronous>, transform_indices = @transform_5, window_bounds = array<i64: 128, 128>}, {pipeline_mode = #tpu.pipeline_mode<synchronous>, transform_indices = @transform_6, window_bounds = array<i64: 1, 128>}, {transform_indices = @transform_7, window_bounds = array<i64: 8, 128>}]} {
    %c0 = arith.constant 0 : index
    %c0_0 = arith.constant 0 : index
    %0 = vector.load %arg1[%c0, %c0_0] : memref<8x4xf32, #tpu.memory_space<vmem>>, vector<8x4xf32>
    %c0_1 = arith.constant 0 : index
    %c0_2 = arith.constant 0 : index
    %1 = vector.load %arg2[%c0_1, %c0_2] : memref<4x128xf32, #tpu.memory_space<vmem>>, vector<4x128xf32>
    %c0_3 = arith.constant 0 : index
    %c0_4 = arith.constant 0 : index
    %2 = vector.load %arg3[%c0_3, %c0_4] : memref<1x128xf32, #tpu.memory_space<vmem>>, vector<1x128xf32>
    %3 = vector.extract_strided_slice %0 {offsets = [0, 0], sizes = [8, 1], strides = [1, 1]} : vector<8x4xf32> to vector<8x1xf32>
    %4 = vector.extract_strided_slice %1 {offsets = [0, 0], sizes = [1, 128], strides = [1, 1]} : vector<4x128xf32> to vector<1x128xf32>
    %5 = vector.broadcast %3 : vector<8x1xf32> to vector<8x128xf32>
    %6 = vector.broadcast %4 : vector<1x128xf32> to vector<8x128xf32>
    %7 = arith.mulf %5, %6 : vector<8x128xf32>
    %8 = vector.broadcast %2 : vector<1x128xf32> to vector<8x128xf32>
    %9 = arith.addf %8, %7 : vector<8x128xf32>
    %10 = vector.extract_strided_slice %0 {offsets = [0, 1], sizes = [8, 1], strides = [1, 1]} : vector<8x4xf32> to vector<8x1xf32>
    %11 = vector.extract_strided_slice %1 {offsets = [1, 0], sizes = [1, 128], strides = [1, 1]} : vector<4x128xf32> to vector<1x128xf32>
    %12 = vector.broadcast %10 : vector<8x1xf32> to vector<8x128xf32>
    %13 = vector.broadcast %11 : vector<1x128xf32> to vector<8x128xf32>
    %14 = arith.mulf %12, %13 : vector<8x128xf32>
    %15 = arith.addf %9, %14 : vector<8x128xf32>
    %16 = vector.extract_strided_slice %0 {offsets = [0, 2], sizes = [8, 1], strides = [1, 1]} : vector<8x4xf32> to vector<8x1xf32>
    %17 = vector.extract_strided_slice %1 {offsets = [2, 0], sizes = [1, 128], strides = [1, 1]} : vector<4x128xf32> to vector<1x128xf32>
    %18 = vector.broadcast %16 : vector<8x1xf32> to vector<8x128xf32>
    %19 = vector.broadcast %17 : vector<1x128xf32> to vector<8x128xf32>
    %20 = arith.mulf %18, %19 : vector<8x128xf32>
    %21 = arith.addf %15, %20 : vector<8x128xf32>
    %22 = vector.extract_strided_slice %0 {offsets = [0, 3], sizes = [8, 1], strides = [1, 1]} : vector<8x4xf32> to vector<8x1xf32>
    %23 = vector.extract_strided_slice %1 {offsets = [3, 0], sizes = [1, 128], strides = [1, 1]} : vector<4x128xf32> to vector<1x128xf32>
    %24 = vector.broadcast %22 : vector<8x1xf32> to vector<8x128xf32>
    %25 = vector.broadcast %23 : vector<1x128xf32> to vector<8x128xf32>
    %26 = arith.mulf %24, %25 : vector<8x128xf32>
    %27 = arith.addf %21, %26 : vector<8x128xf32>
    %cst = arith.constant 0.000000e+00 : f32
    %28 = vector.broadcast %cst : f32 to vector<8x128xf32>
    %29 = arith.maximumf %27, %28 : vector<8x128xf32>
    %30 = arith.truncf %29 : vector<8x128xf32> to vector<8x128xbf16>
    %c0_5 = arith.constant 0 : index
    %c0_6 = arith.constant 0 : index
    %31 = vector.load %arg4[%c0_5, %c0_6] : memref<128x128xbf16, #tpu.memory_space<vmem>>, vector<128x128xbf16>
    %cst_7 = arith.constant dense<0.000000e+00> : vector<8x128xf32>
    %32 = tpu.matmul %30, %31, %cst_7 {dimension_numbers = #tpu.dot_dimension_numbers<[1], [0], [0], [1], [0, 0, 1, 1], [], []>} : vector<8x128xbf16>, vector<128x128xbf16>, vector<8x128xf32> -> vector<8x128xf32>
    %c0_8 = arith.constant 0 : index
    %c0_9 = arith.constant 0 : index
    %33 = vector.load %arg5[%c0_8, %c0_9] : memref<1x128xf32, #tpu.memory_space<vmem>>, vector<1x128xf32>
    %34 = vector.broadcast %33 : vector<1x128xf32> to vector<8x128xf32>
    %35 = arith.addf %32, %34 : vector<8x128xf32>
    %cst_10 = arith.constant 0.000000e+00 : f32
    %36 = vector.broadcast %cst_10 : f32 to vector<8x128xf32>
    %37 = arith.maximumf %35, %36 : vector<8x128xf32>
    %38 = arith.truncf %37 : vector<8x128xf32> to vector<8x128xbf16>
    %c0_11 = arith.constant 0 : index
    %c0_12 = arith.constant 0 : index
    %39 = vector.load %arg6[%c0_11, %c0_12] : memref<128x128xbf16, #tpu.memory_space<vmem>>, vector<128x128xbf16>
    %cst_13 = arith.constant dense<0.000000e+00> : vector<8x128xf32>
    %40 = tpu.matmul %38, %39, %cst_13 {dimension_numbers = #tpu.dot_dimension_numbers<[1], [0], [0], [1], [0, 0, 1, 1], [], []>} : vector<8x128xbf16>, vector<128x128xbf16>, vector<8x128xf32> -> vector<8x128xf32>
    %c0_14 = arith.constant 0 : index
    %c0_15 = arith.constant 0 : index
    %41 = vector.load %arg7[%c0_14, %c0_15] : memref<1x128xf32, #tpu.memory_space<vmem>>, vector<1x128xf32>
    %42 = vector.broadcast %41 : vector<1x128xf32> to vector<8x128xf32>
    %43 = arith.addf %40, %42 : vector<8x128xf32>
    %c0_16 = arith.constant 0 : index
    %c0_17 = arith.constant 0 : index
    %44 = vector.load %arg8[%c0_16, %c0_17] : memref<8x128xf32, #tpu.memory_space<vmem>>, vector<8x128xf32>
    tpu.vector_store %arg8[%c0_16, %c0_17], %43 {strides = array<i32>} : memref<8x128xf32, #tpu.memory_space<vmem>>, vector<8x128xf32>,
    return
  }
  func.func @transform_0(%arg0: i32) -> (i32, i32) {
    %c0_i32 = arith.constant 0 : i32
    %c0_i32_0 = arith.constant 0 : i32
    return %arg0, %c0_i32 : i32, i32
  }
  func.func @transform_1(%arg0: i32) -> (i32, i32) {
    %c0_i32 = arith.constant 0 : i32
    %c0_i32_0 = arith.constant 0 : i32
    %c0_i32_1 = arith.constant 0 : i32
    return %c0_i32, %c0_i32_0 : i32, i32
  }
  func.func @transform_2(%arg0: i32) -> (i32, i32) {
    %c0_i32 = arith.constant 0 : i32
    %c0_i32_0 = arith.constant 0 : i32
    %c0_i32_1 = arith.constant 0 : i32
    return %c0_i32, %c0_i32_0 : i32, i32
  }
  func.func @transform_3(%arg0: i32) -> (i32, i32) {
    %c0_i32 = arith.constant 0 : i32
    %c0_i32_0 = arith.constant 0 : i32
    %c0_i32_1 = arith.constant 0 : i32
    return %c0_i32, %c0_i32_0 : i32, i32
  }
  func.func @transform_4(%arg0: i32) -> (i32, i32) {
    %c0_i32 = arith.constant 0 : i32
    %c0_i32_0 = arith.constant 0 : i32
    %c0_i32_1 = arith.constant 0 : i32
    return %c0_i32, %c0_i32_0 : i32, i32
  }
  func.func @transform_5(%arg0: i32) -> (i32, i32) {
    %c0_i32 = arith.constant 0 : i32
    %c0_i32_0 = arith.constant 0 : i32
    %c0_i32_1 = arith.constant 0 : i32
    return %c0_i32, %c0_i32_0 : i32, i32
  }
  func.func @transform_6(%arg0: i32) -> (i32, i32) {
    %c0_i32 = arith.constant 0 : i32
    %c0_i32_0 = arith.constant 0 : i32
    %c0_i32_1 = arith.constant 0 : i32
    return %c0_i32, %c0_i32_0 : i32, i32
  }
  func.func @transform_7(%arg0: i32) -> (i32, i32) {
    %c0_i32 = arith.constant 0 : i32
    %c0_i32_0 = arith.constant 0 : i32
    return %arg0, %c0_i32 : i32, i32
  }
}

</mosaic_0001>

<llo_original>
// kernel: qnet_forward.1
$region0: #{qnet_forward.1}
  #allocation0 [shape = 'u32[]', space=smem, size = 0x4, offset = 0x4, fixed_abs, tag = 'smem constant byte address 0x4 - core index']
  #allocation1 [shape = 'u32[72,128]{1,0:T(1,128)}', space=vmem, size = 0x9000, scoped, tag = 'internal scratch']
  %s0 = inlined_call_operand.vmem [shape: f32[8,4], index: 0, kind: input, shape index: {}]
  %s1 = inlined_call_operand.vmem [shape: f32[4,128], index: 1, kind: input, shape index: {}]
  %s2 = inlined_call_operand.vmem [shape: f32[1,128], index: 2, kind: input, shape index: {}]
  %s3 = inlined_call_operand.vmem [shape: bf16[128,128], index: 3, kind: input, shape index: {}]
  %s4 = inlined_call_operand.vmem [shape: f32[1,128], index: 4, kind: input, shape index: {}]
  %s5 = inlined_call_operand.vmem [shape: bf16[128,128], index: 5, kind: input, shape index: {}]
  %s6 = inlined_call_operand.vmem [shape: f32[1,128], index: 6, kind: input, shape index: {}]
  %s7 = inlined_call_operand.vmem [shape: f32[8,128], index: 7, kind: output, shape index: {}]
  %s8 = sld [smem:[#allocation0]]
  $region38: #{qnet_forward.1} parent=0
    _
  %s10 = ssub.s32 1, %s8
  %s11 = scalar_select 0, %s10, %s8
  // Predicated region
  $region2: #{qnet_forward.1} parent=0 // pred_check
    _
  $region3: #{qnet_forward.1} parent=0 // pred_check_branch
    %13 = sbr.rel (0) target = $region5
  $region4: #{qnet_forward.1} parent=0 // pred_region
    _
  $region5: #{qnet_forward.1} parent=0 // pred_fallthru
    _
  // Predicated region
  $region6: #{qnet_forward.1} parent=0 // pred_check
    _
  $region7: #{qnet_forward.1} parent=0 // pred_check_branch
    %15 = sbr.rel (0) target = $region9
  $region8: #{qnet_forward.1} parent=0 // pred_region
    _
  $region9: #{qnet_forward.1} parent=0 // pred_fallthru
    _
  // Predicated region
  $region10: #{qnet_forward.1} parent=0 // pred_check
    _
  $region11: #{qnet_forward.1} parent=0 // pred_check_branch
    %17 = sbr.rel (0) target = $region13
  $region12: #{qnet_forward.1} parent=0 // pred_region
    _
  $region13: #{qnet_forward.1} parent=0 // pred_fallthru
    _
  // Predicated region
  $region14: #{qnet_forward.1} parent=0 // pred_check
    _
  $region15: #{qnet_forward.1} parent=0 // pred_check_branch
    %19 = sbr.rel (0) target = $region17
  $region16: #{qnet_forward.1} parent=0 // pred_region
    _
  $region17: #{qnet_forward.1} parent=0 // pred_fallthru
    _
  // Predicated region
  $region18: #{qnet_forward.1} parent=0 // pred_check
    _
  $region19: #{qnet_forward.1} parent=0 // pred_check_branch
    %21 = sbr.rel (0) target = $region21
  $region20: #{qnet_forward.1} parent=0 // pred_region
    _
  $region21: #{qnet_forward.1} parent=0 // pred_fallthru
    _
  // Predicated region
  $region22: #{qnet_forward.1} parent=0 // pred_check
    _
  $region23: #{qnet_forward.1} parent=0 // pred_check_branch
    %23 = sbr.rel (0) target = $region25
  $region24: #{qnet_forward.1} parent=0 // pred_region
    _
  $region25: #{qnet_forward.1} parent=0 // pred_fallthru
    _
  // Predicated region
  $region26: #{qnet_forward.1} parent=0 // pred_check
    _
  $region27: #{qnet_forward.1} parent=0 // pred_check_branch
    %25 = sbr.rel (0) target = $region29
  $region28: #{qnet_forward.1} parent=0 // pred_region
    _
  $region29: #{qnet_forward.1} parent=0 // pred_fallthru
    _
  %v26 = vld [vmem:[%s0] sm:$0xff]
  %v27 = vld [vmem:[%s1] sm:$0xf]
  %v28 = vld [vmem:[%s2] sm:$0x1]
  %30 = vset.pattern.permute.xlu0 0
  %31 = vperm.xlu0 %30, %v26
  %v32 = vpop.permute.xlu0 %31
  %v34 = vperm.slane %v27, 0
  %v35 = vmul.f32 %v32, %v34
  %v37 = vperm.slane %v28, 0
  %v39 = vadd.f32 %v37, %v35
  %40 = vset.pattern.permute.xlu0 1
  %41 = vperm.xlu0 %40, %v26
  %v42 = vpop.permute.xlu0 %41
  %v44 = vperm.slane %v27, 1
  %v45 = vmul.f32 %v42, %v44
  %v46 = vadd.f32 %v39, %v45
  %47 = vset.pattern.permute.xlu0 2
  %48 = vperm.xlu0 %47, %v26
  %v49 = vpop.permute.xlu0 %48
  %v51 = vperm.slane %v27, 2
  %v52 = vmul.f32 %v49, %v51
  %v53 = vadd.f32 %v46, %v52
  %54 = vset.pattern.permute.xlu0 3
  %55 = vperm.xlu0 %54, %v26
  %v56 = vpop.permute.xlu0 %55
  %v58 = vperm.slane %v27, 3
  %v59 = vmul.f32 %v56, %v58
  %v60 = vadd.f32 %v53, %v59
  %v61 = vmax.f32 %v60, 0.0
  %v62 = vpack.c.bf16 %v61, %v61
  %v63 = vld [vmem:[%s3] sm:$0xf]
  %v64 = vld [vmem:[%s3 + $0x4] sm:$0xf]
  %v65 = vld [vmem:[%s3 + $0x8] sm:$0xf]
  %v66 = vld [vmem:[%s3 + $0xc] sm:$0xf]
  %v67 = vld [vmem:[%s3 + $0x10] sm:$0xf]
  %v68 = vld [vmem:[%s3 + $0x14] sm:$0xf]
  %v69 = vld [vmem:[%s3 + $0x18] sm:$0xf]
  %v70 = vld [vmem:[%s3 + $0x1c] sm:$0xf]
  %v71 = vld [vmem:[%s3 + $0x20] sm:$0xf]
  %v72 = vld [vmem:[%s3 + $0x24] sm:$0xf]
  %v73 = vld [vmem:[%s3 + $0x28] sm:$0xf]
  %v74 = vld [vmem:[%s3 + $0x2c] sm:$0xf]
  %v75 = vld [vmem:[%s3 + $0x30] sm:$0xf]
  %v76 = vld [vmem:[%s3 + $0x34] sm:$0xf]
  %v77 = vld [vmem:[%s3 + $0x38] sm:$0xf]
  %v78 = vld [vmem:[%s3 + $0x3c] sm:$0xf]
  %v79 = vld [vmem:[%s4] sm:$0x1]
  %v81 = vperm.slane %v79, 0
  %v99 = vunpack.c.l.b16 %v63
  %v100 = vunpack.c.l.b16 %v64
  %v101 = vunpack.c.l.b16 %v65
  %v102 = vunpack.c.l.b16 %v66
  %v103 = vunpack.c.l.b16 %v67
  %v104 = vunpack.c.l.b16 %v68
  %v105 = vunpack.c.l.b16 %v69
  %v106 = vunpack.c.l.b16 %v70
  %v107 = vunpack.c.l.b16 %v71
  %v108 = vunpack.c.l.b16 %v72
  %v109 = vunpack.c.l.b16 %v73
  %v110 = vunpack.c.l.b16 %v74
  %v111 = vunpack.c.l.b16 %v75
  %v112 = vunpack.c.l.b16 %v76
  %v113 = vunpack.c.l.b16 %v77
  %v114 = vunpack.c.l.b16 %v78
  %v115 = vpack.c.b16 %v100, %v99
  %v116 = vpack.c.b16 %v102, %v101
  %v117 = vpack.c.b16 %v104, %v103
  %v118 = vpack.c.b16 %v106, %v105
  %v119 = vpack.c.b16 %v108, %v107
  %v120 = vpack.c.b16 %v110, %v109
  %v121 = vpack.c.b16 %v112, %v111
  %v122 = vpack.c.b16 %v114, %v113
  %131 = vmatpush.bf16.msra.mxu0 %v122
  %132 = vmatpush.bf16.msra.mxu0 %v121
  %133 = vmatpush.bf16.msra.mxu0 %v120
  %134 = vmatpush.bf16.msra.mxu0 %v119
  %135 = vmatpush.bf16.msra.mxu0 %v118
  %136 = vmatpush.bf16.msra.mxu0 %v117
  %137 = vmatpush.bf16.msra.mxu0 %v116
  %138 = vmatpush.bf16.msra.mxu0 %v115
  %139 = vmatmul.bf16.gmra.mxu0 %v62
  %v140 = vpop.f32.mrf.mxu0
  %v141 = vadd.f32 %v81, %v140
  %v142 = vpop.f32.mrf.mxu0
  %143 = vdwg.mxu0
  %v144 = vmax.f32 %v141, 0.0
  %v145 = vpack.c.bf16 %v144, %v144
  %v146 = vld [vmem:[%s5] sm:$0xf]
  %v147 = vld [vmem:[%s5 + $0x4] sm:$0xf]
  %v148 = vld [vmem:[%s5 + $0x8] sm:$0xf]
  %v149 = vld [vmem:[%s5 + $0xc] sm:$0xf]
  %v150 = vld [vmem:[%s5 + $0x10] sm:$0xf]
  %v151 = vld [vmem:[%s5 + $0x14] sm:$0xf]
  %v152 = vld [vmem:[%s5 + $0x18] sm:$0xf]
  %v153 = vld [vmem:[%s5 + $0x1c] sm:$0xf]
  %v154 = vld [vmem:[%s5 + $0x20] sm:$0xf]
  %v155 = vld [vmem:[%s5 + $0x24] sm:$0xf]
  %v156 = vld [vmem:[%s5 + $0x28] sm:$0xf]
  %v157 = vld [vmem:[%s5 + $0x2c] sm:$0xf]
  %v158 = vld [vmem:[%s5 + $0x30] sm:$0xf]
  %v159 = vld [vmem:[%s5 + $0x34] sm:$0xf]
  %v160 = vld [vmem:[%s5 + $0x38] sm:$0xf]
  %v161 = vld [vmem:[%s5 + $0x3c] sm:$0xf]
  %v162 = vld [vmem:[%s6] sm:$0x1]
  %v164 = vperm.slane %v162, 0
  %v182 = vunpack.c.l.b16 %v146
  %v183 = vunpack.c.l.b16 %v147
  %v184 = vunpack.c.l.b16 %v148
  %v185 = vunpack.c.l.b16 %v149
  %v186 = vunpack.c.l.b16 %v150
  %v187 = vunpack.c.l.b16 %v151
  %v188 = vunpack.c.l.b16 %v152
  %v189 = vunpack.c.l.b16 %v153
  %v190 = vunpack.c.l.b16 %v154
  %v191 = vunpack.c.l.b16 %v155
  %v192 = vunpack.c.l.b16 %v156
  %v193 = vunpack.c.l.b16 %v157
  %v194 = vunpack.c.l.b16 %v158
  %v195 = vunpack.c.l.b16 %v159
  %v196 = vunpack.c.l.b16 %v160
  %v197 = vunpack.c.l.b16 %v161
  %v198 = vpack.c.b16 %v183, %v182
  %v199 = vpack.c.b16 %v185, %v184
  %v200 = vpack.c.b16 %v187, %v186
  %v201 = vpack.c.b16 %v189, %v188
  %v202 = vpack.c.b16 %v191, %v190
  %v203 = vpack.c.b16 %v193, %v192
  %v204 = vpack.c.b16 %v195, %v194
  %v205 = vpack.c.b16 %v197, %v196
  %214 = vmatpush.bf16.msra.mxu0 %v205
  %215 = vmatpush.bf16.msra.mxu0 %v204
  %216 = vmatpush.bf16.msra.mxu0 %v203
  %217 = vmatpush.bf16.msra.mxu0 %v202
  %218 = vmatpush.bf16.msra.mxu0 %v201
  %219 = vmatpush.bf16.msra.mxu0 %v200
  %220 = vmatpush.bf16.msra.mxu0 %v199
  %221 = vmatpush.bf16.msra.mxu0 %v198
  %222 = vmatmul.bf16.gmra.mxu0 %v145
  %v223 = vpop.f32.mrf.mxu0
  %v224 = vadd.f32 %v164, %v223
  %v225 = vpop.f32.mrf.mxu0
  %226 = vdwg.mxu0
  %227 = vst [vmem:[%s7] sm:$0xff] %v224
  // Predicated region
  $region30: #{qnet_forward.1} parent=0 // pred_check
    _
  $region31: #{qnet_forward.1} parent=0 // pred_check_branch
    %229 = sbr.rel (0) target = $region33
  $region32: #{qnet_forward.1} parent=0 // pred_region
    _
  $region33: #{qnet_forward.1} parent=0 // pred_fallthru
    _
  // Predicated region
  $region34: #{qnet_forward.1} parent=0 // pred_check
    _
  $region35: #{qnet_forward.1} parent=0 // pred_check_branch
    %231 = sbr.rel (0) target = $region37
  $region36: #{qnet_forward.1} parent=0 // pred_region
    _
  $region37: #{qnet_forward.1} parent=0 // pred_fallthru
    _

</llo_original>
